<compile_context>
chip_gen: v5e
topology: v5e:2x2
jax: 0.10.0
libtpu: 0.0.40
codegen_flags: <defaults>
</compile_context>

<pallas_src>
import jax
import jax.numpy as jnp
import numpy as np
from jax import lax
from jax.experimental import pallas as pl
from jax.experimental.pallas import tpu as pltpu


# ----------------------- wrapper-side constant matrices -----------------------

def _conv_repack_matrix(b, l_in, pad_in, k, stride, pad_out):
    """Selects each packed element's valid strided conv outputs out of the raw
    stride-1 sliding output and re-packs them with `pad_out` zeros of
    per-element padding for the next layer (pad columns end up exactly 0)."""
    seg_in = l_in + 2 * pad_in
    l_raw = b * seg_in - (k - 1)
    l_out = (l_in - 1) // stride + 1
    seg_out = l_out + 2 * pad_out
    m = np.zeros((l_raw, b * seg_out), np.float32)
    for j in range(b):
        for i in range(l_out):
            m[j * seg_in + stride * i, j * seg_out + pad_out + i] = 1.0
    return m


def _identity_repack_matrix(b, l_in, pad_in, pool):
    """Identity path on the packed padded input: optional
    AvgPool1d(2, ceil_mode=True) and removal of the per-element padding."""
    seg_in = l_in + 2 * pad_in
    l_out = -(-l_in // 2) if pool else l_in
    m = np.zeros((b * seg_in, b * l_out), np.float32)
    for j in range(b):
        for i in range(l_out):
            col = j * l_out + i
            if pool:
                cnt = min(2, l_in - 2 * i)
                for t in range(cnt):
                    m[j * seg_in + pad_in + 2 * i + t, col] = 1.0 / cnt
            else:
                m[j * seg_in + pad_in + i, col] = 1.0
    return m


# ----------------------------------- kernel -----------------------------------

def _make_resblock_kernel(layer_meta, has_idconv, matmul_dtype):
    """layer_meta: tuple of (k, act, has_repack) per main conv layer."""

    def kernel(x_ref, *rest):
        o_ref = rest[-1]
        prm = rest[:-1]
        x = x_ref[0].astype(jnp.float32)                  # (C_in, B*seg_x)

        # main path: per layer, ONE im2col matmul + bias (+ ReLU) + repack
        idx = 0
        h = x
        for (k, act, has_repack) in layer_meta:
            w = prm[idx][...]                             # (C_out, K*C_in) bf16
            bias = prm[idx + 1][...]                      # (C_out, 1)      f32
            idx += 2
            hk = h.astype(matmul_dtype)
            if k == 1:
                stack = hk
            else:
                l_slide = h.shape[1] - (k - 1)
                stack = jnp.concatenate(
                    [hk[:, kk:kk + l_slide] for kk in range(k)], axis=0)
            h = jnp.dot(w, stack, preferred_element_type=jnp.float32) + bias
            if act:
                h = jnp.maximum(h, 0.0)
            if has_repack:
                s = prm[idx][...]                         # (L_raw, packed) f32
                idx += 1
                h = jnp.dot(h, s, preferred_element_type=jnp.float32)

        # identity path: pool / un-pad repack (+ optional folded 1x1 conv)
        s_id = prm[idx][...]
        idx += 1
        ident = jnp.dot(x, s_id, preferred_element_type=jnp.float32)
        if has_idconv:
            w_id = prm[idx][...]                          # (C_out, C_in) bf16
            b_id = prm[idx + 1][...]                      # (C_out, 1)    f32
            ident = jnp.dot(w_id, ident.astype(matmul_dtype),
                            preferred_element_type=jnp.float32) + b_id

        o_ref[0] = jnp.maximum(h + ident, 0.0).astype(o_ref.dtype)

    return kernel


# ---------------------------------- wrapper -----------------------------------

def resblock_pallas(x, main_params, id_params, *, expansion, stride,
                    b_tile=None, matmul_dtype=jnp.bfloat16):
    """x: (N, C_in, L). main_params/id_params: (w(C_out,C_in,K), scale(C,1),
    shift(C,1)) per conv_layer, BatchNorm folded to affine (eval semantics)."""
    n, c_in, l = x.shape
    n_main = len(main_params)
    ks = [int(w.shape[-1]) for (w, _, _) in main_params]
    strides = [stride, 1] if expansion == 1 else [1, stride, 1]
    assert len(strides) == n_main
    nf = int(main_params[-1][0].shape[0])
    has_idconv = id_params is not None
    has_pool = stride != 1

    # static per-layer packing geometry
    pads = [k // 2 for k in ks]
    l_cur = l
    geom = []                              # (l_in, pad_in, pad_out)
    for li in range(n_main):
        pad_out = pads[li + 1] if li + 1 < n_main else 0
        geom.append((l_cur, pads[li], pad_out))
        l_cur = (l_cur - 1) // strides[li] + 1
    l_final = l_cur

    # batch tile: aim for a lane-dense (>=128 lanes) packed output slab
    if b_tile is None:
        b_tile = max(1, min(n, -(-128 // l_final)))
    n_pad = (-n) % b_tile
    if n_pad:
        x = jnp.concatenate([x, jnp.zeros((n_pad, c_in, l), x.dtype)], axis=0)
    n_tot = n + n_pad
    n_blk = n_tot // b_tile

    # pack the input: per-element zero pad for conv0, batch folded into lanes
    p0 = pads[0]
    seg_x = l + 2 * p0
    xp = jnp.pad(x, ((0, 0), (0, 0), (p0, p0)))
    xp = xp.reshape(n_blk, b_tile, c_in, seg_x)
    xp = jnp.transpose(xp, (0, 2, 1, 3)).reshape(n_blk, c_in, b_tile * seg_x)

    # fold BN scale into weights (tap-major columns), keep shift as f32 bias
    def fold(w, sc):
        c_out, c_inn, k = w.shape
        wf = (w * sc[:, :, None]).transpose(0, 2, 1).reshape(c_out, k * c_inn)
        return wf.astype(matmul_dtype)

    flat, specs, layer_meta = [], [], []

    def add(arr):
        flat.append(arr)
        specs.append(pl.BlockSpec(arr.shape, lambda i, _nd=arr.ndim: (0,) * _nd))

    for li, ((w, sc, sh), (l_in, pad_in, pad_out)) in enumerate(
            zip(main_params, geom)):
        add(fold(w, sc))
        add(sh.astype(jnp.float32))
        trivial = (ks[li] == 1 and strides[li] == 1
                   and pad_in == 0 and pad_out == 0)
        if not trivial:
            add(jnp.asarray(_conv_repack_matrix(
                b_tile, l_in, pad_in, ks[li], strides[li], pad_out)))
        layer_meta.append((ks[li], li < n_main - 1, not trivial))

    add(jnp.asarray(_identity_repack_matrix(b_tile, l, p0, has_pool)))
    if has_idconv:
        w_id, sc_id, sh_id = id_params
        add(fold(w_id, sc_id))
        add(sh_id.astype(jnp.float32))

    kernel = _make_resblock_kernel(tuple(layer_meta), has_idconv, matmul_dtype)

    out_packed = pl.pallas_call(
        kernel,
        out_shape=jax.ShapeDtypeStruct((n_blk, nf, b_tile * l_final), x.dtype),
        grid=(n_blk,),
        in_specs=[pl.BlockSpec((1, c_in, b_tile * seg_x),
                               lambda i: (i, 0, 0))] + specs,
        out_specs=pl.BlockSpec((1, nf, b_tile * l_final), lambda i: (i, 0, 0)),
        compiler_params=pltpu.CompilerParams(
            dimension_semantics=("parallel",)),
    )(xp, *flat)

    out = out_packed.reshape(n_blk, nf, b_tile, l_final)
    out = jnp.transpose(out, (0, 2, 1, 3)).reshape(n_tot, nf, l_final)
    return out[:n]


# ------------------------------ reference (JAX) --------------------------------

def _conv1d_ref(xx, w, st):
    return lax.conv_general_dilated(
        xx, w, window_strides=(st,),
        padding=[(w.shape[-1] // 2, w.shape[-1] // 2)],
        dimension_numbers=("NCH", "OIH", "NCH"))


def _avgpool2_ceil_ref(xx):
    l = xx.shape[-1]
    lo = -(-l // 2)
    return jnp.stack([xx[:, :, 2 * i:2 * i + 2].mean(-1) for i in range(lo)],
                     axis=-1)


def _resblock_ref(x, main_params, id_params, *, expansion, stride):
    strides = [stride, 1] if expansion == 1 else [1, stride, 1]
    h = x
    for li, (w, sc, sh) in enumerate(main_params):
        h = _conv1d_ref(h, w, strides[li]) * sc[None] + sh[None]
        if li < len(main_params) - 1:
            h = jnp.maximum(h, 0.0)
    ident = x if stride == 1 else _avgpool2_ceil_ref(x)
    if id_params is not None:
        w, sc, sh = id_params
        ident = _conv1d_ref(ident, w, 1) * sc[None] + sh[None]
    return jnp.maximum(h + ident, 0.0)


# ----------------------------------- main ---------------------------------------

if __name__ == "__main__":
    eps = 1e-5

    def bn_fold(key, c):
        # Synthetic eval-mode BN fold (random gamma/beta/mean/var so every
        # compute path is exercised non-trivially).
        kg, kb, km, kv = jax.random.split(key, 4)
        gamma = jax.random.uniform(kg, (c,), jnp.float32, 0.5, 1.5)
        beta = 0.1 * jax.random.normal(kb, (c,), jnp.float32)
        mean = 0.1 * jax.random.normal(km, (c,), jnp.float32)
        var = jax.random.uniform(kv, (c,), jnp.float32, 0.5, 1.5)
        scale = gamma * lax.rsqrt(var + eps)
        shift = beta - mean * scale
        return scale.reshape(c, 1), shift.reshape(c, 1)

    def make_params(key, expansion, ni, nh):
        ni_eff, nf = ni * expansion, nh * expansion
        if expansion == 1:
            shapes = [(nh, ni_eff, 5), (nf, nh, 3)]
        else:
            shapes = [(nh, ni_eff, 5), (nh, nh, 3), (nf, nh, 1)]
        keys = jax.random.split(key, 2 * len(shapes) + 2)
        main = []
        for si, shp in enumerate(shapes):
            w = 0.1 * jax.random.normal(keys[2 * si], shp, jnp.float32)
            sc, sh = bn_fold(keys[2 * si + 1], shp[0])
            main.append((w, sc, sh))
        if ni_eff != nf:
            w = 0.1 * jax.random.normal(keys[-2], (nf, ni_eff, 1), jnp.float32)
            sc, sh = bn_fold(keys[-1], nf)
            idp = (w, sc, sh)
        else:
            idp = None
        return main, idp

    root = jax.random.PRNGKey(0)
    # (expansion, ni, nh, stride): exercises idconv+pool / noop-id+noop-pool /
    # 3-conv main path with pool and no idconv.
    configs = [(1, 2, 4, 2), (1, 4, 4, 1), (4, 2, 2, 2)]
    N, L = 32, 16

    for ci, (expansion, ni, nh, stride) in enumerate(configs):
        kp, kx = jax.random.split(jax.random.fold_in(root, ci))
        main_p, id_p = make_params(kp, expansion, ni, nh)
        x = jax.random.normal(kx, (N, ni * expansion, L), jnp.float32)

        out = resblock_pallas(x, main_p, id_p,
                              expansion=expansion, stride=stride)
        out = jax.block_until_ready(out)

        ref = _resblock_ref(x, main_p, id_p,
                            expansion=expansion, stride=stride)
        np.testing.assert_allclose(np.asarray(out), np.asarray(ref),
                                   rtol=2e-2, atol=2e-2)

    print("KERNEL_OK")
</pallas_src>

<mosaic_0001>
module attributes {stable_mosaic.version = 11 : i64} {
  func.func @kernel(%arg0: i32, %arg1: memref<1x2x320xf32, #tpu.memory_space<vmem>>, %arg2: memref<4x10xbf16, #tpu.memory_space<vmem>>, %arg3: memref<4x1xf32, #tpu.memory_space<vmem>>, %arg4: memref<316x160xf32, #tpu.memory_space<vmem>>, %arg5: memref<4x12xbf16, #tpu.memory_space<vmem>>, %arg6: memref<4x1xf32, #tpu.memory_space<vmem>>, %arg7: memref<158x128xf32, #tpu.memory_space<vmem>>, %arg8: memref<320x128xf32, #tpu.memory_space<vmem>>, %arg9: memref<4x2xbf16, #tpu.memory_space<vmem>>, %arg10: memref<4x1xf32, #tpu.memory_space<vmem>>, %arg11: memref<1x4x128xf32, #tpu.memory_space<vmem>>) attributes {dimension_semantics = [#tpu.dimension_semantics<parallel>], iteration_bounds = array<i64: 2>, scalar_prefetch = 0 : i64, scratch_operands = 0 : i64, tpu.core_type = #tpu.core_type<tc>, window_params = [{transform_indices = @transform_0, window_bounds = array<i64: 1, 2, 320>}, {pipeline_mode = #tpu.pipeline_mode<synchronous>, transform_indices = @transform_1, window_bounds = array<i64: 4, 10>}, {pipeline_mode = #tpu.pipeline_mode<synchronous>, transform_indices = @transform_2, window_bounds = array<i64: 4, 1>}, {pipeline_mode = #tpu.pipeline_mode<synchronous>, transform_indices = @transform_3, window_bounds = array<i64: 316, 160>}, {pipeline_mode = #tpu.pipeline_mode<synchronous>, transform_indices = @transform_4, window_bounds = array<i64: 4, 12>}, {pipeline_mode = #tpu.pipeline_mode<synchronous>, transform_indices = @transform_5, window_bounds = array<i64: 4, 1>}, {pipeline_mode = #tpu.pipeline_mode<synchronous>, transform_indices = @transform_6, window_bounds = array<i64: 158, 128>}, {pipeline_mode = #tpu.pipeline_mode<synchronous>, transform_indices = @transform_7, window_bounds = array<i64: 320, 128>}, {pipeline_mode = #tpu.pipeline_mode<synchronous>, transform_indices = @transform_8, window_bounds = array<i64: 4, 2>}, {pipeline_mode = #tpu.pipeline_mode<synchronous>, transform_indices = @transform_9, window_bounds = array<i64: 4, 1>}, {transform_indices = @transform_10, window_bounds = array<i64: 1, 4, 128>}]} {
    %c0 = arith.constant 0 : index
    %c0_0 = arith.constant 0 : index
    %c0_1 = arith.constant 0 : index
    %0 = vector.load %arg1[%c0, %c0_0, %c0_1] : memref<1x2x320xf32, #tpu.memory_space<vmem>>, vector<1x2x320xf32>
    %1 = vector.shape_cast %0 : vector<1x2x320xf32> to vector<2x320xf32>
    %c0_2 = arith.constant 0 : index
    %c0_3 = arith.constant 0 : index
    %2 = vector.load %arg2[%c0_2, %c0_3] : memref<4x10xbf16, #tpu.memory_space<vmem>>, vector<4x10xbf16>
    %c0_4 = arith.constant 0 : index
    %c0_5 = arith.constant 0 : index
    %3 = vector.load %arg3[%c0_4, %c0_5] : memref<4x1xf32, #tpu.memory_space<vmem>>, vector<4x1xf32>
    %4 = arith.truncf %1 : vector<2x320xf32> to vector<2x320xbf16>
    %5 = vector.extract_strided_slice %4 {offsets = [0, 0], sizes = [2, 316], strides = [1, 1]} : vector<2x320xbf16> to vector<2x316xbf16>
    %6 = vector.extract_strided_slice %4 {offsets = [0, 1], sizes = [2, 316], strides = [1, 1]} : vector<2x320xbf16> to vector<2x316xbf16>
    %7 = vector.extract_strided_slice %4 {offsets = [0, 2], sizes = [2, 316], strides = [1, 1]} : vector<2x320xbf16> to vector<2x316xbf16>
    %8 = vector.extract_strided_slice %4 {offsets = [0, 3], sizes = [2, 316], strides = [1, 1]} : vector<2x320xbf16> to vector<2x316xbf16>
    %9 = vector.extract_strided_slice %4 {offsets = [0, 4], sizes = [2, 316], strides = [1, 1]} : vector<2x320xbf16> to vector<2x316xbf16>
    %10 = tpu.concatenate %5, %6, %7, %8, %9 in 0 : vector<2x316xbf16>, vector<2x316xbf16>, vector<2x316xbf16>, vector<2x316xbf16>, vector<2x316xbf16> -> vector<10x316xbf16>
    %cst = arith.constant dense<0.000000e+00> : vector<4x316xf32>
    %11 = tpu.matmul %2, %10, %cst {dimension_numbers = #tpu.dot_dimension_numbers<[1], [0], [0], [1], [0, 0, 1, 1], [], []>} : vector<4x10xbf16>, vector<10x316xbf16>, vector<4x316xf32> -> vector<4x316xf32>
    %12 = vector.broadcast %3 : vector<4x1xf32> to vector<4x316xf32>
    %13 = arith.addf %11, %12 : vector<4x316xf32>
    %cst_6 = arith.constant 0.000000e+00 : f32
    %14 = vector.broadcast %cst_6 : f32 to vector<4x316xf32>
    %15 = arith.maximumf %13, %14 : vector<4x316xf32>
    %c0_7 = arith.constant 0 : index
    %c0_8 = arith.constant 0 : index
    %16 = vector.load %arg4[%c0_7, %c0_8] : memref<316x160xf32, #tpu.memory_space<vmem>>, vector<316x160xf32>
    %cst_9 = arith.constant dense<0.000000e+00> : vector<4x160xf32>
    %17 = tpu.matmul %15, %16, %cst_9 {dimension_numbers = #tpu.dot_dimension_numbers<[1], [0], [0], [1], [0, 0, 1, 1], [], []>} : vector<4x316xf32>, vector<316x160xf32>, vector<4x160xf32> -> vector<4x160xf32>
    %c0_10 = arith.constant 0 : index
    %c0_11 = arith.constant 0 : index
    %18 = vector.load %arg5[%c0_10, %c0_11] : memref<4x12xbf16, #tpu.memory_space<vmem>>, vector<4x12xbf16>
    %c0_12 = arith.constant 0 : index
    %c0_13 = arith.constant 0 : index
    %19 = vector.load %arg6[%c0_12, %c0_13] : memref<4x1xf32, #tpu.memory_space<vmem>>, vector<4x1xf32>
    %20 = arith.truncf %17 : vector<4x160xf32> to vector<4x160xbf16>
    %21 = vector.extract_strided_slice %20 {offsets = [0, 0], sizes = [4, 158], strides = [1, 1]} : vector<4x160xbf16> to vector<4x158xbf16>
    %22 = vector.extract_strided_slice %20 {offsets = [0, 1], sizes = [4, 158], strides = [1, 1]} : vector<4x160xbf16> to vector<4x158xbf16>
    %23 = vector.extract_strided_slice %20 {offsets = [0, 2], sizes = [4, 158], strides = [1, 1]} : vector<4x160xbf16> to vector<4x158xbf16>
    %24 = tpu.concatenate %21, %22, %23 in 0 : vector<4x158xbf16>, vector<4x158xbf16>, vector<4x158xbf16> -> vector<12x158xbf16>
    %cst_14 = arith.constant dense<0.000000e+00> : vector<4x158xf32>
    %25 = tpu.matmul %18, %24, %cst_14 {dimension_numbers = #tpu.dot_dimension_numbers<[1], [0], [0], [1], [0, 0, 1, 1], [], []>} : vector<4x12xbf16>, vector<12x158xbf16>, vector<4x158xf32> -> vector<4x158xf32>
    %26 = vector.broadcast %19 : vector<4x1xf32> to vector<4x158xf32>
    %27 = arith.addf %25, %26 : vector<4x158xf32>
    %c0_15 = arith.constant 0 : index
    %c0_16 = arith.constant 0 : index
    %28 = vector.load %arg7[%c0_15, %c0_16] : memref<158x128xf32, #tpu.memory_space<vmem>>, vector<158x128xf32>
    %cst_17 = arith.constant dense<0.000000e+00> : vector<4x128xf32>
    %29 = tpu.matmul %27, %28, %cst_17 {dimension_numbers = #tpu.dot_dimension_numbers<[1], [0], [0], [1], [0, 0, 1, 1], [], []>} : vector<4x158xf32>, vector<158x128xf32>, vector<4x128xf32> -> vector<4x128xf32>
    %c0_18 = arith.constant 0 : index
    %c0_19 = arith.constant 0 : index
    %30 = vector.load %arg8[%c0_18, %c0_19] : memref<320x128xf32, #tpu.memory_space<vmem>>, vector<320x128xf32>
    %cst_20 = arith.constant dense<0.000000e+00> : vector<2x128xf32>
    %31 = tpu.matmul %1, %30, %cst_20 {dimension_numbers = #tpu.dot_dimension_numbers<[1], [0], [0], [1], [0, 0, 1, 1], [], []>} : vector<2x320xf32>, vector<320x128xf32>, vector<2x128xf32> -> vector<2x128xf32>
    %c0_21 = arith.constant 0 : index
    %c0_22 = arith.constant 0 : index
    %32 = vector.load %arg9[%c0_21, %c0_22] : memref<4x2xbf16, #tpu.memory_space<vmem>>, vector<4x2xbf16>
    %c0_23 = arith.constant 0 : index
    %c0_24 = arith.constant 0 : index
    %33 = vector.load %arg10[%c0_23, %c0_24] : memref<4x1xf32, #tpu.memory_space<vmem>>, vector<4x1xf32>
    %34 = arith.truncf %31 : vector<2x128xf32> to vector<2x128xbf16>
    %cst_25 = arith.constant dense<0.000000e+00> : vector<4x128xf32>
    %35 = tpu.matmul %32, %34, %cst_25 {dimension_numbers = #tpu.dot_dimension_numbers<[1], [0], [0], [1], [0, 0, 1, 1], [], []>} : vector<4x2xbf16>, vector<2x128xbf16>, vector<4x128xf32> -> vector<4x128xf32>
    %36 = vector.broadcast %33 : vector<4x1xf32> to vector<4x128xf32>
    %37 = arith.addf %35, %36 : vector<4x128xf32>
    %38 = arith.addf %29, %37 : vector<4x128xf32>
    %cst_26 = arith.constant 0.000000e+00 : f32
    %39 = vector.broadcast %cst_26 : f32 to vector<4x128xf32>
    %40 = arith.maximumf %38, %39 : vector<4x128xf32>
    %c0_27 = arith.constant 0 : index
    %c0_28 = arith.constant 0 : index
    %c0_29 = arith.constant 0 : index
    %41 = vector.load %arg11[%c0_27, %c0_28, %c0_29] : memref<1x4x128xf32, #tpu.memory_space<vmem>>, vector<1x4x128xf32>
    %42 = vector.shape_cast %41 : vector<1x4x128xf32> to vector<4x128xf32>
    %43 = vector.shape_cast %40 : vector<4x128xf32> to vector<1x4x128xf32>
    tpu.vector_store %arg11[%c0_27, %c0_28, %c0_29], %43 {strides = array<i32>} : memref<1x4x128xf32, #tpu.memory_space<vmem>>, vector<1x4x128xf32>,
    return
  }
  func.func @transform_0(%arg0: i32) -> (i32, i32, i32) {
    %c0_i32 = arith.constant 0 : i32
    %c0_i32_0 = arith.constant 0 : i32
    %c0_i32_1 = arith.constant 0 : i32
    return %arg0, %c0_i32, %c0_i32_0 : i32, i32, i32
  }
  func.func @transform_1(%arg0: i32) -> (i32, i32) {
    %c0_i32 = arith.constant 0 : i32
    %c0_i32_0 = arith.constant 0 : i32
    %c0_i32_1 = arith.constant 0 : i32
    return %c0_i32, %c0_i32_0 : i32, i32
  }
  func.func @transform_2(%arg0: i32) -> (i32, i32) {
    %c0_i32 = arith.constant 0 : i32
    %c0_i32_0 = arith.constant 0 : i32
    %c0_i32_1 = arith.constant 0 : i32
    return %c0_i32, %c0_i32_0 : i32, i32
  }
  func.func @transform_3(%arg0: i32) -> (i32, i32) {
    %c0_i32 = arith.constant 0 : i32
    %c0_i32_0 = arith.constant 0 : i32
    %c0_i32_1 = arith.constant 0 : i32
    return %c0_i32, %c0_i32_0 : i32, i32
  }
  func.func @transform_4(%arg0: i32) -> (i32, i32) {
    %c0_i32 = arith.constant 0 : i32
    %c0_i32_0 = arith.constant 0 : i32
    %c0_i32_1 = arith.constant 0 : i32
    return %c0_i32, %c0_i32_0 : i32, i32
  }
  func.func @transform_5(%arg0: i32) -> (i32, i32) {
    %c0_i32 = arith.constant 0 : i32
    %c0_i32_0 = arith.constant 0 : i32
    %c0_i32_1 = arith.constant 0 : i32
    return %c0_i32, %c0_i32_0 : i32, i32
  }
  func.func @transform_6(%arg0: i32) -> (i32, i32) {
    %c0_i32 = arith.constant 0 : i32
    %c0_i32_0 = arith.constant 0 : i32
    %c0_i32_1 = arith.constant 0 : i32
    return %c0_i32, %c0_i32_0 : i32, i32
  }
  func.func @transform_7(%arg0: i32) -> (i32, i32) {
    %c0_i32 = arith.constant 0 : i32
    %c0_i32_0 = arith.constant 0 : i32
    %c0_i32_1 = arith.constant 0 : i32
    return %c0_i32, %c0_i32_0 : i32, i32
  }
  func.func @transform_8(%arg0: i32) -> (i32, i32) {
    %c0_i32 = arith.constant 0 : i32
    %c0_i32_0 = arith.constant 0 : i32
    %c0_i32_1 = arith.constant 0 : i32
    return %c0_i32, %c0_i32_0 : i32, i32
  }
  func.func @transform_9(%arg0: i32) -> (i32, i32) {
    %c0_i32 = arith.constant 0 : i32
    %c0_i32_0 = arith.constant 0 : i32
    %c0_i32_1 = arith.constant 0 : i32
    return %c0_i32, %c0_i32_0 : i32, i32
  }
  func.func @transform_10(%arg0: i32) -> (i32, i32, i32) {
    %c0_i32 = arith.constant 0 : i32
    %c0_i32_0 = arith.constant 0 : i32
    %c0_i32_1 = arith.constant 0 : i32
    return %arg0, %c0_i32, %c0_i32_0 : i32, i32, i32
  }
}

</mosaic_0001>

<llo_original>
// kernel: tpu_custom_call.1
$region0: #{tpu_custom_call.1}
  #allocation0 [shape = 'u32[]', space=smem, size = 0x4, offset = 0x4, fixed_abs, tag = 'smem constant byte address 0x4 - core index']
  #allocation1 [shape = 'u32[72,128]{1,0:T(1,128)}', space=vmem, size = 0x9000, scoped, tag = 'internal scratch']
  %s0 = inlined_call_operand.vmem [shape: f32[2,2,320], index: 0, kind: input, shape index: {}]
  %s1 = inlined_call_operand.vmem [shape: bf16[4,10], index: 1, kind: input, shape index: {}]
  %s2 = inlined_call_operand.vmem [shape: f32[4,1], index: 2, kind: input, shape index: {}]
  %s3 = inlined_call_operand.vmem [shape: f32[316,160], index: 3, kind: input, shape index: {}]
  %s4 = inlined_call_operand.vmem [shape: bf16[4,12], index: 4, kind: input, shape index: {}]
  %s5 = inlined_call_operand.vmem [shape: f32[4,1], index: 5, kind: input, shape index: {}]
  %s6 = inlined_call_operand.vmem [shape: f32[158,128], index: 6, kind: input, shape index: {}]
  %s7 = inlined_call_operand.vmem [shape: f32[320,128], index: 7, kind: input, shape index: {}]
  %s8 = inlined_call_operand.vmem [shape: bf16[4,2], index: 8, kind: input, shape index: {}]
  %s9 = inlined_call_operand.vmem [shape: f32[4,1], index: 9, kind: input, shape index: {}]
  %s10 = inlined_call_operand.hbm [shape: f32[2,4,128], index: 10, kind: output, shape index: {}]
  %s11 = sld [smem:[#allocation0]]
  $region73: #{tpu_custom_call.1} parent=0
    _
  %s13 = ssub.s32 1, %s11
  %s14 = scalar_select 0, %s13, %s11
  $region1: #{tpu_custom_call.1} parent=0
    #allocation2 [shape = 'u8[4096]{0}', space=vmem, size = 0x1000, scoped, tag = 'output window, operand 0']
    #allocation3 [shape = 's32[2]{0}', space=sflag, size = 0x8, scoped, tag = 'scoped memory for tpu_custom_call.1']
    %15 = vsyncpa [#allocation3], 0
    %s16 = scalar_lea.sflag [#allocation3], 1
    %17 = vsyncpa %s16, 0
    loop: start=0, step=1, limit=4
    $region2: #{tpu_custom_call.1} parent=1 // loop_pre_header
      _
    $region3: #{tpu_custom_call.1} parent=1 // loop_header
      %s19 = sphi 0, %s23
      %p20 = scmp.ge.s32.totalorder %s19, 4
      %s29 = sphi 0, %s31
      %s32 = sphi 0, %s29
      %s33 = sphi 0, %s32
      %s49 = sphi 0, %s33
      %s53 = sphi 0, %s53
      %s55 = sphi 0, %s53
      %s56 = sphi 0, %s55
      %s70 = sphi 0, %s56
      %s74 = sphi 0, %s74
      %s76 = sphi 0, %s74
      %s77 = sphi 0, %s76
      %s91 = sphi 0, %s77
      %s95 = sphi 0, %s95
      %s97 = sphi 0, %s95
      %s98 = sphi 0, %s97
      %s112 = sphi 0, %s98
      %s116 = sphi 0, %s116
      %s118 = sphi 0, %s116
      %s119 = sphi 0, %s118
      %s133 = sphi 0, %s119
      %s137 = sphi 0, %s137
      %s139 = sphi 0, %s137
      %s140 = sphi 0, %s139
      %s154 = sphi 0, %s140
      %s158 = sphi 0, %s158
      %s160 = sphi 0, %s158
      %s161 = sphi 0, %s160
      %s175 = sphi 0, %s161
      %s179 = sphi 0, %s179
      %s181 = sphi 0, %s179
      %s182 = sphi 0, %s181
      %s196 = sphi 0, %s182
      %s200 = sphi 0, %s200
      %s202 = sphi 0, %s200
      %s203 = sphi 0, %s202
      %s217 = sphi 0, %s203
      %s221 = sphi 0, %s221
      %s223 = sphi 0, %s221
      %s224 = sphi 0, %s223
      %s238 = sphi 0, %s224
      %s244 = sphi 0, %s246
      %s247 = sphi 0, %s244
      %s248 = sphi 0, %s247
      %s264 = sphi 0, %s248
    $region4: #{tpu_custom_call.1} parent=1 // loop_header_branch
      %22 = sbr.rel (%p20) target = $region8
    $region5: #{tpu_custom_call.1} parent=1 // loop_body
      %s24 = ssub.s32 %s19, 1
      %s25 = ssub.s32 %s19, 2
      %s26 = sadd.s32 %s19, 1
      %s27 = ssub.s32 %s19, %s26
      %p28 = scmp.eq.s32.totalorder %s27, 0
      %s30 = sadd.s32 %s29, 1
      %s31 = scalar_select %p28, %s29, %s30
      %p34 = pneg %p28
      %p35 = scmp.eq.s32.totalorder %s19, 1
      %p36 = por %p34, %p35
      %p37 = scmp.ne.s32.totalorder %s29, %s32
      %p38 = scmp.eq.s32.totalorder %s19, 0
      %p39 = por %p37, %p38
      %p40 = scmp.ne.s32.totalorder %s29, %s32
      %p41 = scmp.eq.s32.totalorder %s24, 1
      %p42 = por %p40, %p41
      %p43 = scmp.ne.s32.totalorder %s32, %s33
      %p44 = scmp.eq.s32.totalorder %s24, 0
      %p45 = por %p43, %p44
      %p46 = scmp.ne.s32.totalorder %s32, %s33
      %p47 = scmp.eq.s32.totalorder %s25, 1
      %p48 = por %p46, %p47
      %p50 = scmp.ne.s32.totalorder %s33, %s49
      %p51 = scmp.eq.s32.totalorder %s25, 0
      %p52 = por %p50, %p51
      %s54 = sadd.s32 %s53, 1
      %p57 = scmp.eq.s32.totalorder %s19, 1
      %p58 = scmp.ne.s32.totalorder %s53, %s55
      %p59 = scmp.eq.s32.totalorder %s19, 0
      %p60 = por %p58, %p59
      %p61 = scmp.ne.s32.totalorder %s53, %s55
      %p62 = scmp.eq.s32.totalorder %s24, 1
      %p63 = por %p61, %p62
      %p64 = scmp.ne.s32.totalorder %s55, %s56
      %p65 = scmp.eq.s32.totalorder %s24, 0
      %p66 = por %p64, %p65
      %p67 = scmp.ne.s32.totalorder %s55, %s56
      %p68 = scmp.eq.s32.totalorder %s25, 1
      %p69 = por %p67, %p68
      %p71 = scmp.ne.s32.totalorder %s56, %s70
      %p72 = scmp.eq.s32.totalorder %s25, 0
      %p73 = por %p71, %p72
      %s75 = sadd.s32 %s74, 1
      %p78 = scmp.eq.s32.totalorder %s19, 1
      %p79 = scmp.ne.s32.totalorder %s74, %s76
      %p80 = scmp.eq.s32.totalorder %s19, 0
      %p81 = por %p79, %p80
      %p82 = scmp.ne.s32.totalorder %s74, %s76
      %p83 = scmp.eq.s32.totalorder %s24, 1
      %p84 = por %p82, %p83
      %p85 = scmp.ne.s32.totalorder %s76, %s77
      %p86 = scmp.eq.s32.totalorder %s24, 0
      %p87 = por %p85, %p86
      %p88 = scmp.ne.s32.totalorder %s76, %s77
      %p89 = scmp.eq.s32.totalorder %s25, 1
      %p90 = por %p88, %p89
      %p92 = scmp.ne.s32.totalorder %s77, %s91
      %p93 = scmp.eq.s32.totalorder %s25, 0
      %p94 = por %p92, %p93
      %s96 = sadd.s32 %s95, 1
      %p99 = scmp.eq.s32.totalorder %s19, 1
      %p100 = scmp.ne.s32.totalorder %s95, %s97
      %p101 = scmp.eq.s32.totalorder %s19, 0
      %p102 = por %p100, %p101
      %p103 = scmp.ne.s32.totalorder %s95, %s97
      %p104 = scmp.eq.s32.totalorder %s24, 1
      %p105 = por %p103, %p104
      %p106 = scmp.ne.s32.totalorder %s97, %s98
      %p107 = scmp.eq.s32.totalorder %s24, 0
      %p108 = por %p106, %p107
      %p109 = scmp.ne.s32.totalorder %s97, %s98
      %p110 = scmp.eq.s32.totalorder %s25, 1
      %p111 = por %p109, %p110
      %p113 = scmp.ne.s32.totalorder %s98, %s112
      %p114 = scmp.eq.s32.totalorder %s25, 0
      %p115 = por %p113, %p114
      %s117 = sadd.s32 %s116, 1
      %p120 = scmp.eq.s32.totalorder %s19, 1
      %p121 = scmp.ne.s32.totalorder %s116, %s118
      %p122 = scmp.eq.s32.totalorder %s19, 0
      %p123 = por %p121, %p122
      %p124 = scmp.ne.s32.totalorder %s116, %s118
      %p125 = scmp.eq.s32.totalorder %s24, 1
      %p126 = por %p124, %p125
      %p127 = scmp.ne.s32.totalorder %s118, %s119
      %p128 = scmp.eq.s32.totalorder %s24, 0
      %p129 = por %p127, %p128
      %p130 = scmp.ne.s32.totalorder %s118, %s119
      %p131 = scmp.eq.s32.totalorder %s25, 1
      %p132 = por %p130, %p131
      %p134 = scmp.ne.s32.totalorder %s119, %s133
      %p135 = scmp.eq.s32.totalorder %s25, 0
      %p136 = por %p134, %p135
      %s138 = sadd.s32 %s137, 1
      %p141 = scmp.eq.s32.totalorder %s19, 1
      %p142 = scmp.ne.s32.totalorder %s137, %s139
      %p143 = scmp.eq.s32.totalorder %s19, 0
      %p144 = por %p142, %p143
      %p145 = scmp.ne.s32.totalorder %s137, %s139
      %p146 = scmp.eq.s32.totalorder %s24, 1
      %p147 = por %p145, %p146
      %p148 = scmp.ne.s32.totalorder %s139, %s140
      %p149 = scmp.eq.s32.totalorder %s24, 0
      %p150 = por %p148, %p149
      %p151 = scmp.ne.s32.totalorder %s139, %s140
      %p152 = scmp.eq.s32.totalorder %s25, 1
      %p153 = por %p151, %p152
      %p155 = scmp.ne.s32.totalorder %s140, %s154
      %p156 = scmp.eq.s32.totalorder %s25, 0
      %p157 = por %p155, %p156
      %s159 = sadd.s32 %s158, 1
      %p162 = scmp.eq.s32.totalorder %s19, 1
      %p163 = scmp.ne.s32.totalorder %s158, %s160
      %p164 = scmp.eq.s32.totalorder %s19, 0
      %p165 = por %p163, %p164
      %p166 = scmp.ne.s32.totalorder %s158, %s160
      %p167 = scmp.eq.s32.totalorder %s24, 1
      %p168 = por %p166, %p167
      %p169 = scmp.ne.s32.totalorder %s160, %s161
      %p170 = scmp.eq.s32.totalorder %s24, 0
      %p171 = por %p169, %p170
      %p172 = scmp.ne.s32.totalorder %s160, %s161
      %p173 = scmp.eq.s32.totalorder %s25, 1
      %p174 = por %p172, %p173
      %p176 = scmp.ne.s32.totalorder %s161, %s175
      %p177 = scmp.eq.s32.totalorder %s25, 0
      %p178 = por %p176, %p177
      %s180 = sadd.s32 %s179, 1
      %p183 = scmp.eq.s32.totalorder %s19, 1
      %p184 = scmp.ne.s32.totalorder %s179, %s181
      %p185 = scmp.eq.s32.totalorder %s19, 0
      %p186 = por %p184, %p185
      %p187 = scmp.ne.s32.totalorder %s179, %s181
      %p188 = scmp.eq.s32.totalorder %s24, 1
      %p189 = por %p187, %p188
      %p190 = scmp.ne.s32.totalorder %s181, %s182
      %p191 = scmp.eq.s32.totalorder %s24, 0
      %p192 = por %p190, %p191
      %p193 = scmp.ne.s32.totalorder %s181, %s182
      %p194 = scmp.eq.s32.totalorder %s25, 1
      %p195 = por %p193, %p194
      %p197 = scmp.ne.s32.totalorder %s182, %s196
      %p198 = scmp.eq.s32.totalorder %s25, 0
      %p199 = por %p197, %p198
      %s201 = sadd.s32 %s200, 1
      %p204 = scmp.eq.s32.totalorder %s19, 1
      %p205 = scmp.ne.s32.totalorder %s200, %s202
      %p206 = scmp.eq.s32.totalorder %s19, 0
      %p207 = por %p205, %p206
      %p208 = scmp.ne.s32.totalorder %s200, %s202
      %p209 = scmp.eq.s32.totalorder %s24, 1
      %p210 = por %p208, %p209
      %p211 = scmp.ne.s32.totalorder %s202, %s203
      %p212 = scmp.eq.s32.totalorder %s24, 0
      %p213 = por %p211, %p212
      %p214 = scmp.ne.s32.totalorder %s202, %s203
      %p215 = scmp.eq.s32.totalorder %s25, 1
      %p216 = por %p214, %p215
      %p218 = scmp.ne.s32.totalorder %s203, %s217
      %p219 = scmp.eq.s32.totalorder %s25, 0
      %p220 = por %p218, %p219
      %s222 = sadd.s32 %s221, 1
      %p225 = scmp.eq.s32.totalorder %s19, 1
      %p226 = scmp.ne.s32.totalorder %s221, %s223
      %p227 = scmp.eq.s32.totalorder %s19, 0
      %p228 = por %p226, %p227
      %p229 = scmp.ne.s32.totalorder %s221, %s223
      %p230 = scmp.eq.s32.totalorder %s24, 1
      %p231 = por %p229, %p230
      %p232 = scmp.ne.s32.totalorder %s223, %s224
      %p233 = scmp.eq.s32.totalorder %s24, 0
      %p234 = por %p232, %p233
      %p235 = scmp.ne.s32.totalorder %s223, %s224
      %p236 = scmp.eq.s32.totalorder %s25, 1
      %p237 = por %p235, %p236
      %p239 = scmp.ne.s32.totalorder %s224, %s238
      %p240 = scmp.eq.s32.totalorder %s25, 0
      %p241 = por %p239, %p240
      %s242 = ssub.s32 %s19, %s26
      %p243 = scmp.eq.s32.totalorder %s242, 0
      %s245 = sadd.s32 %s244, 1
      %s246 = scalar_select %p243, %s244, %s245
      %p249 = pneg %p243
      %p250 = scmp.eq.s32.totalorder %s19, 1
      %p251 = por %p249, %p250
      %p252 = scmp.ne.s32.totalorder %s244, %s247
      %p253 = scmp.eq.s32.totalorder %s19, 0
      %p254 = por %p252, %p253
      %p255 = scmp.ne.s32.totalorder %s244, %s247
      %p256 = scmp.eq.s32.totalorder %s24, 1
      %p257 = por %p255, %p256
      %p258 = scmp.ne.s32.totalorder %s247, %s248
      %p259 = scmp.eq.s32.totalorder %s24, 0
      %p260 = por %p258, %p259
      %p261 = scmp.ne.s32.totalorder %s247, %s248
      %p262 = scmp.eq.s32.totalorder %s25, 1
      %p263 = por %p261, %p262
      %p265 = scmp.ne.s32.totalorder %s248, %s264
      %p266 = scmp.eq.s32.totalorder %s25, 0
      %p267 = por %p265, %p266
      %p268 = scmp.le.s32.totalorder 1, %s19
      %p269 = scmp.lt.s32.totalorder %s19, 3
      %p270 = pnand %p268, %p269
      %p271 = pneg %p270
      // Predicated region
      $region9: #{tpu_custom_call.1} parent=5 // pred_check
        _
      $region10: #{tpu_custom_call.1} parent=5 // pred_check_branch
        %273 = sbr.rel (%p270) target = $region12
      $region11: #{tpu_custom_call.1} parent=5 // pred_region
        %s274 = ssub.s32 %s19, 1
        // Predicated region
        $region13: #{tpu_custom_call.1} parent=11 // pred_check
          %p275 = pneg %p66
        $region14: #{tpu_custom_call.1} parent=11 // pred_check_branch
          %277 = sbr.rel (%p275) target = $region16
        $region15: #{tpu_custom_call.1} parent=11 // pred_region
          _
        $region16: #{tpu_custom_call.1} parent=11 // pred_fallthru
          _
        // Predicated region
        $region17: #{tpu_custom_call.1} parent=11 // pred_check
          %p278 = pneg %p87
        $region18: #{tpu_custom_call.1} parent=11 // pred_check_branch
          %280 = sbr.rel (%p278) target = $region20
        $region19: #{tpu_custom_call.1} parent=11 // pred_region
          _
        $region20: #{tpu_custom_call.1} parent=11 // pred_fallthru
          _
        // Predicated region
        $region21: #{tpu_custom_call.1} parent=11 // pred_check
          %p281 = pneg %p108
        $region22: #{tpu_custom_call.1} parent=11 // pred_check_branch
          %283 = sbr.rel (%p281) target = $region24
        $region23: #{tpu_custom_call.1} parent=11 // pred_region
          _
        $region24: #{tpu_custom_call.1} parent=11 // pred_fallthru
          _
        // Predicated region
        $region25: #{tpu_custom_call.1} parent=11 // pred_check
          %p284 = pneg %p129
        $region26: #{tpu_custom_call.1} parent=11 // pred_check_branch
          %286 = sbr.rel (%p284) target = $region28
        $region27: #{tpu_custom_call.1} parent=11 // pred_region
          _
        $region28: #{tpu_custom_call.1} parent=11 // pred_fallthru
          _
        // Predicated region
        $region29: #{tpu_custom_call.1} parent=11 // pred_check
          %p287 = pneg %p150
        $region30: #{tpu_custom_call.1} parent=11 // pred_check_branch
          %289 = sbr.rel (%p287) target = $region32
        $region31: #{tpu_custom_call.1} parent=11 // pred_region
          _
        $region32: #{tpu_custom_call.1} parent=11 // pred_fallthru
          _
        // Predicated region
        $region33: #{tpu_custom_call.1} parent=11 // pred_check
          %p290 = pneg %p171
        $region34: #{tpu_custom_call.1} parent=11 // pred_check_branch
          %292 = sbr.rel (%p290) target = $region36
        $region35: #{tpu_custom_call.1} parent=11 // pred_region
          _
        $region36: #{tpu_custom_call.1} parent=11 // pred_fallthru
          _
        // Predicated region
        $region37: #{tpu_custom_call.1} parent=11 // pred_check
          %p293 = pneg %p192
        $region38: #{tpu_custom_call.1} parent=11 // pred_check_branch
          %295 = sbr.rel (%p293) target = $region40
        $region39: #{tpu_custom_call.1} parent=11 // pred_region
          _
        $region40: #{tpu_custom_call.1} parent=11 // pred_fallthru
          _
        // Predicated region
        $region41: #{tpu_custom_call.1} parent=11 // pred_check
          %p296 = pneg %p213
        $region42: #{tpu_custom_call.1} parent=11 // pred_check_branch
          %298 = sbr.rel (%p296) target = $region44
        $region43: #{tpu_custom_call.1} parent=11 // pred_region
          _
        $region44: #{tpu_custom_call.1} parent=11 // pred_fallthru
          _
        // Predicated region
        $region45: #{tpu_custom_call.1} parent=11 // pred_check
          %p299 = pneg %p234
        $region46: #{tpu_custom_call.1} parent=11 // pred_check_branch
          %301 = sbr.rel (%p299) target = $region48
        $region47: #{tpu_custom_call.1} parent=11 // pred_region
          _
        $region48: #{tpu_custom_call.1} parent=11 // pred_fallthru
          _
      $region12: #{tpu_custom_call.1} parent=5 // pred_fallthru
        _
      %p302 = scmp.lt.s32.totalorder %s19, 2
      // Predicated region
      $region49: #{tpu_custom_call.1} parent=5 // pred_check
        %p303 = pneg %p302
      $region50: #{tpu_custom_call.1} parent=5 // pred_check_branch
        %305 = sbr.rel (%p303) target = $region52
      $region51: #{tpu_custom_call.1} parent=5 // pred_region
        // Predicated region
        $region53: #{tpu_custom_call.1} parent=51 // pred_check
          %p306 = pneg %p39
        $region54: #{tpu_custom_call.1} parent=51 // pred_check_branch
          %308 = sbr.rel (%p306) target = $region56
        $region55: #{tpu_custom_call.1} parent=51 // pred_region
          %p309 = scmp.lt.s32.totalorder %s19, 1
          %s310 = scalar_select %p309, %s19, 1
          %s311 = smul.addr %s310, 3
          %s312 = smul.addr %s311, 2
          %s313 = scalar_lea.vmem %s0, %s312
        $region56: #{tpu_custom_call.1} parent=51 // pred_fallthru
          _
      $region52: #{tpu_custom_call.1} parent=5 // pred_fallthru
        _
      %p314 = scmp.le.s32.totalorder 1, %s19
      %p315 = scmp.lt.s32.totalorder %s19, 3
      %p316 = pnand %p314, %p315
      %p317 = pneg %p316
      // Predicated region
      $region57: #{tpu_custom_call.1} parent=5 // pred_check
        _
      $region58: #{tpu_custom_call.1} parent=5 // pred_check_branch
        %319 = sbr.rel (%p316) target = $region60
      $region59: #{tpu_custom_call.1} parent=5 // pred_region
        %s320 = ssub.s32 %s19, 1
        %p321 = scmp.lt.s32.totalorder %s24, 1
        %s322 = scalar_select %p321, %s24, 1
        %s323 = smul.addr %s322, 3
        %s324 = smul.addr %s323, 2
        %s325 = scalar_lea.vmem %s0, %s324
        %p326 = pneg %p45
        %p327 = pneg %p42
        %p328 = pneg %p66
        %p329 = pneg %p63
        %p330 = pneg %p87
        %p331 = pneg %p84
        %p332 = pneg %p108
        %p333 = pneg %p105
        %p334 = pneg %p129
        %p335 = pneg %p126
        %p336 = pneg %p150
        %p337 = pneg %p147
        %p338 = pneg %p171
        %p339 = pneg %p168
        %p340 = pneg %p192
        %p341 = pneg %p189
        %p342 = pneg %p213
        %p343 = pneg %p210
        %p344 = pneg %p234
        %p345 = pneg %p231
        %p346 = pneg %p260
        %p347 = pneg %p257
        %s348 = sand.u32 %s247, 1
        %s349 = scalar_lea.sflag [#allocation3], %s348
        %s350 = sand.u32 %s247, 1
        %s351 = smul.addr %s350, 4
        %s352 = scalar_lea.vmem [#allocation2], %s351
        %p353 = scmp.lt.s32.totalorder %s24, 1
        %s354 = scalar_select %p353, %s24, 1
        %s355 = smul.addr %s354, 3
        %s356 = smul.addr %s355, 2
        %s357 = scalar_lea.vmem %s0, %s356
        %v359 = vld [vmem:[%s357] sm:$0x3f]
        %v360 = vld [vmem:[%s1] sm:$0x3]
        %v361 = vld [vmem:[%s2] sm:$0xf]
        %363 = vst [vmem:[#allocation1] ss:$4 sm:$0xff] %v359
        %v364 = vld.sshfl [vmem:[#allocation1] sm:$0xff pattern:$0x73625140]
        %v365 = vld.sshfl [vmem:[#allocation1 + $0x8] sm:$0xff pattern:$0x73625140]
        %v366 = vld.sshfl [vmem:[#allocation1 + $0x10] sm:$0xff pattern:$0x73625140]
        %v370 = vpack.c.bf16 %v365, %v364
        %v371 = vpack.c.bf16 %v366, %v366
        %v374 = vunpack.c.l.b16 %v370
        %v375 = vunpack.c.h.b16 %v370
        %v376 = vunpack.c.l.b16 %v371
        %v377 = vpack.c.b16 %v374, %v374
        %v378 = vpack.c.b16 %v375, %v375
        %v379 = vpack.c.b16 %v376, %v376
        %v380 = vrot.slane %v377, 7
        %v381 = vrot.slane %v378, 7
        %v382 = vrot.slane %v379, 7
        %383 = vrot.lane.b32.xlu0 %v380, 127
        %v384 = vpop.permute.xlu0 %383
        %385 = vrot.lane.b32.xlu0 %v381, 127
        %v386 = vpop.permute.xlu0 %385
        %387 = vrot.lane.b32.xlu0 %v382, 127
        %v388 = vpop.permute.xlu0 %387
        %vm389 = vcmask 1039360
        %v390 = vsel %vm389, %v384, %v386
        %v391 = vsel %vm389, %v386, %v388
        %v392 = vrot.slane %v377, 6
        %v393 = vrot.slane %v378, 6
        %v394 = vrot.slane %v379, 6
        %395 = vrot.lane.b32.xlu0 %v392, 126
        %v396 = vpop.permute.xlu0 %395
        %397 = vrot.lane.b32.xlu0 %v393, 126
        %v398 = vpop.permute.xlu0 %397
        %399 = vrot.lane.b32.xlu0 %v394, 126
        %v400 = vpop.permute.xlu0 %399
        %vm401 = vcmask 1031168
        %v402 = vsel %vm401, %v396, %v398
        %v403 = vsel %vm401, %v398, %v400
        %v404 = vrot.slane %v377, 5
        %v405 = vrot.slane %v378, 5
        %v406 = vrot.slane %v379, 5
        %407 = vrot.lane.b32.xlu0 %v404, 125
        %v408 = vpop.permute.xlu0 %407
        %409 = vrot.lane.b32.xlu0 %v405, 125
        %v410 = vpop.permute.xlu0 %409
        %411 = vrot.lane.b32.xlu0 %v406, 125
        %v412 = vpop.permute.xlu0 %411
        %vm413 = vcmask 1022976
        %v414 = vsel %vm413, %v408, %v410
        %v415 = vsel %vm413, %v410, %v412
        %416 = vrot.lane.b32.xlu0 %v377, 124
        %v417 = vpop.permute.xlu0 %416
        %418 = vrot.lane.b32.xlu0 %v378, 124
        %v419 = vpop.permute.xlu0 %418
        %420 = vrot.lane.b32.xlu0 %v379, 124
        %v421 = vpop.permute.xlu0 %420
        %vm422 = vcmask 1014784
        %v423 = vsel %vm422, %v417, %v419
        %v424 = vsel %vm422, %v419, %v421
        %vm425 = vcmask 1040384
        %v428 = vsel %vm425, %v377, %v390
        %v431 = vsel %vm425, %v378, %v391
        %v434 = vsel %vm425, %v379, %v388
        %vm435 = vcmask 1041408
        %v437 = vsel %vm435, %v428, %v402
        %v439 = vsel %vm435, %v431, %v403
        %v441 = vsel %vm435, %v434, %v400
        %vm442 = vcmask 1042432
        %v444 = vsel %vm442, %v437, %v414
        %v446 = vsel %vm442, %v439, %v415
        %v448 = vsel %vm442, %v441, %v412
        %vm449 = vcmask 1043456
        %v451 = vsel %vm449, %v444, %v423
        %v453 = vsel %vm449, %v446, %v424
        %v455 = vsel %vm449, %v448, %v421
        %457 = vset.pattern.permute.xlu0 0
        %458 = vperm.xlu0 %457, %v361
        %v459 = vpop.permute.xlu0 %458
        %vm461 = vcmask 80896
        %v463 = vsel %vm461, %v360, 0
        %vm465 = vcmask 1044480
        %v466 = vsel %vm465, %v451, 0
        %v468 = vsel %vm465, %v453, 0
        %v470 = vsel %vm465, %v455, 0
        %472 = vmatpush.bf16.msra.mxu0 0
        %473 = vmatpush.bf16.msra.mxu0 0
        %474 = vmatpush.bf16.msra.mxu0 0
        %475 = vmatpush.bf16.msra.mxu0 0
        %476 = vmatpush.bf16.msra.mxu0 0
        %477 = vmatpush.bf16.msra.mxu0 0
        %478 = vmatpush.bf16.msra.mxu0 0
        %479 = vmatpush.bf16.msra.mxu0 %v466
        %480 = vmatmul.bf16.gmra.mxu0 %v463
        %v481 = vpop.f32.mrf.mxu0
        %v482 = vadd.f32 %v459, %v481
        %v483 = vpop.f32.mrf.mxu0
        %484 = vdwg.mxu0
        %485 = vmatpush.bf16.msra.mxu0 0
        %486 = vmatpush.bf16.msra.mxu0 0
        %487 = vmatpush.bf16.msra.mxu0 0
        %488 = vmatpush.bf16.msra.mxu0 0
        %489 = vmatpush.bf16.msra.mxu0 0
        %490 = vmatpush.bf16.msra.mxu0 0
        %491 = vmatpush.bf16.msra.mxu0 0
        %492 = vmatpush.bf16.msra.mxu0 %v468
        %493 = vmatmul.bf16.gmra.mxu0 %v463
        %v494 = vpop.f32.mrf.mxu0
        %v495 = vadd.f32 %v459, %v494
        %v496 = vpop.f32.mrf.mxu0
        %497 = vdwg.mxu0
        %498 = vmatpush.bf16.msra.mxu0 0
        %499 = vmatpush.bf16.msra.mxu0 0
        %500 = vmatpush.bf16.msra.mxu0 0
        %501 = vmatpush.bf16.msra.mxu0 0
        %502 = vmatpush.bf16.msra.mxu0 0
        %503 = vmatpush.bf16.msra.mxu0 0
        %504 = vmatpush.bf16.msra.mxu0 0
        %505 = vmatpush.bf16.msra.mxu0 %v470
        %506 = vmatmul.bf16.gmra.mxu0 %v463
        %v507 = vpop.f32.mrf.mxu0
        %v508 = vadd.f32 %v459, %v507
        %v509 = vpop.f32.mrf.mxu0
        %510 = vdwg.mxu0
        %v511 = vmax.f32 %v482, 0.0
        %v512 = vmax.f32 %v495, 0.0
        %v513 = vmax.f32 %v508, 0.0
        %v514 = vld [vmem:[%s3] sm:$0xff]
        %v515 = vld [vmem:[%s3 + $0x8] sm:$0xff]
        %v516 = vld [vmem:[%s3 + $0x10] sm:$0xff]
        %v517 = vld [vmem:[%s3 + $0x18] sm:$0xff]
        %v518 = vld [vmem:[%s3 + $0x20] sm:$0xff]
        %v519 = vld [vmem:[%s3 + $0x28] sm:$0xff]
        %v520 = vld [vmem:[%s3 + $0x30] sm:$0xff]
        %v521 = vld [vmem:[%s3 + $0x38] sm:$0xff]
        %v522 = vld [vmem:[%s3 + $0x40] sm:$0xff]
        %v523 = vld [vmem:[%s3 + $0x48] sm:$0xff]
        %v524 = vld [vmem:[%s3 + $0x50] sm:$0xff]
        %v525 = vld [vmem:[%s3 + $0x58] sm:$0xff]
        %v526 = vld [vmem:[%s3 + $0x60] sm:$0xff]
        %v527 = vld [vmem:[%s3 + $0x68] sm:$0xff]
        %v528 = vld [vmem:[%s3 + $0x70] sm:$0xff]
        %v529 = vld [vmem:[%s3 + $0x78] sm:$0xff]
        %v530 = vld [vmem:[%s3 + $0x80] sm:$0xff]
        %v531 = vld [vmem:[%s3 + $0x88] sm:$0xff]
        %v532 = vld [vmem:[%s3 + $0x90] sm:$0xff]
        %v533 = vld [vmem:[%s3 + $0x98] sm:$0xff]
        %v534 = vld [vmem:[%s3 + $0xa0] sm:$0xff]
        %v535 = vld [vmem:[%s3 + $0xa8] sm:$0xff]
        %v536 = vld [vmem:[%s3 + $0xb0] sm:$0xff]
        %v537 = vld [vmem:[%s3 + $0xb8] sm:$0xff]
        %v538 = vld [vmem:[%s3 + $0xc0] sm:$0xff]
        %v539 = vld [vmem:[%s3 + $0xc8] sm:$0xff]
        %v540 = vld [vmem:[%s3 + $0xd0] sm:$0xff]
        %v541 = vld [vmem:[%s3 + $0xd8] sm:$0xff]
        %v542 = vld [vmem:[%s3 + $0xe0] sm:$0xff]
        %v543 = vld [vmem:[%s3 + $0xe8] sm:$0xff]
        %v544 = vld [vmem:[%s3 + $0xf0] sm:$0xff]
        %v545 = vld [vmem:[%s3 + $0xf8] sm:$0xff]
        %v546 = vld [vmem:[%s3 + $0x100] sm:$0xff]
        %v547 = vld [vmem:[%s3 + $0x108] sm:$0xff]
        %v548 = vld [vmem:[%s3 + $0x110] sm:$0xff]
        %v549 = vld [vmem:[%s3 + $0x118] sm:$0xff]
        %v550 = vld [vmem:[%s3 + $0x120] sm:$0xff]
        %v551 = vld [vmem:[%s3 + $0x128] sm:$0xff]
        %v552 = vld [vmem:[%s3 + $0x130] sm:$0xff]
        %v553 = vld [vmem:[%s3 + $0x138] sm:$0xff]
        %v554 = vld [vmem:[%s3 + $0x140] sm:$0xff]
        %v555 = vld [vmem:[%s3 + $0x148] sm:$0xff]
        %v556 = vld [vmem:[%s3 + $0x150] sm:$0xff]
        %v557 = vld [vmem:[%s3 + $0x158] sm:$0xff]
        %v558 = vld [vmem:[%s3 + $0x160] sm:$0xff]
        %v559 = vld [vmem:[%s3 + $0x168] sm:$0xff]
        %v560 = vld [vmem:[%s3 + $0x170] sm:$0xff]
        %v561 = vld [vmem:[%s3 + $0x178] sm:$0xff]
        %v562 = vld [vmem:[%s3 + $0x180] sm:$0xff]
        %v563 = vld [vmem:[%s3 + $0x188] sm:$0xff]
        %v564 = vld [vmem:[%s3 + $0x190] sm:$0xff]
        %v565 = vld [vmem:[%s3 + $0x198] sm:$0xff]
        %v566 = vld [vmem:[%s3 + $0x1a0] sm:$0xff]
        %v567 = vld [vmem:[%s3 + $0x1a8] sm:$0xff]
        %v568 = vld [vmem:[%s3 + $0x1b0] sm:$0xff]
        %v569 = vld [vmem:[%s3 + $0x1b8] sm:$0xff]
        %v570 = vld [vmem:[%s3 + $0x1c0] sm:$0xff]
        %v571 = vld [vmem:[%s3 + $0x1c8] sm:$0xff]
        %v572 = vld [vmem:[%s3 + $0x1d0] sm:$0xff]
        %v573 = vld [vmem:[%s3 + $0x1d8] sm:$0xff]
        %v574 = vld [vmem:[%s3 + $0x1e0] sm:$0xff]
        %v575 = vld [vmem:[%s3 + $0x1e8] sm:$0xff]
        %v576 = vld [vmem:[%s3 + $0x1f0] sm:$0xff]
        %v577 = vld [vmem:[%s3 + $0x1f8] sm:$0xff]
        %v578 = vld [vmem:[%s3 + $0x200] sm:$0xff]
        %v579 = vld [vmem:[%s3 + $0x208] sm:$0xff]
        %v580 = vld [vmem:[%s3 + $0x210] sm:$0xff]
        %v581 = vld [vmem:[%s3 + $0x218] sm:$0xff]
        %v582 = vld [vmem:[%s3 + $0x220] sm:$0xff]
        %v583 = vld [vmem:[%s3 + $0x228] sm:$0xff]
        %v584 = vld [vmem:[%s3 + $0x230] sm:$0xff]
        %v585 = vld [vmem:[%s3 + $0x238] sm:$0xff]
        %v586 = vld [vmem:[%s3 + $0x240] sm:$0xff]
        %v587 = vld [vmem:[%s3 + $0x248] sm:$0xff]
        %v588 = vld [vmem:[%s3 + $0x250] sm:$0xff]
        %v589 = vld [vmem:[%s3 + $0x258] sm:$0xff]
        %v590 = vld [vmem:[%s3 + $0x260] sm:$0xff]
        %v591 = vld [vmem:[%s3 + $0x268] sm:$0xff]
        %v592 = vld [vmem:[%s3 + $0x270] sm:$0xf]
        %v593 = vld [vmem:[%s3 + $0x278] sm:$0xf]
        %vm594 = vcmask 490496
        %v596 = vsel %vm594, %v513, 0
        %v599 = vsel %vm449, %v592, 0
        %v602 = vsel %vm449, %v593, 0
        %604 = vmatpush.msra.mxu0 %v544
        %605 = vmatpush.msra.mxu0 %v542
        %606 = vmatpush.msra.mxu0 %v540
        %607 = vmatpush.msra.mxu0 %v538
        %608 = vmatpush.msra.mxu0 %v536
        %609 = vmatpush.msra.mxu0 %v534
        %610 = vmatpush.msra.mxu0 %v532
        %611 = vmatpush.msra.mxu0 %v530
        %612 = vmatpush.msra.mxu0 %v528
        %613 = vmatpush.msra.mxu0 %v526
        %614 = vmatpush.msra.mxu0 %v524
        %615 = vmatpush.msra.mxu0 %v522
        %616 = vmatpush.msra.mxu0 %v520
        %617 = vmatpush.msra.mxu0 %v518
        %618 = vmatpush.msra.mxu0 %v516
        %619 = vmatpush.msra.mxu0 %v514
        %620 = vmatmul.f32.gmra.mxu0 %v511
        %v621 = vpop.f32.mrf.mxu0
        %v622 = vadd.f32 0.0, %v621
        %623 = vdwg.mxu0
        %624 = vmatpush.msra.mxu0 %v576
        %625 = vmatpush.msra.mxu0 %v574
        %626 = vmatpush.msra.mxu0 %v572
        %627 = vmatpush.msra.mxu0 %v570
        %628 = vmatpush.msra.mxu0 %v568
        %629 = vmatpush.msra.mxu0 %v566
        %630 = vmatpush.msra.mxu0 %v564
        %631 = vmatpush.msra.mxu0 %v562
        %632 = vmatpush.msra.mxu0 %v560
        %633 = vmatpush.msra.mxu0 %v558
        %634 = vmatpush.msra.mxu0 %v556
        %635 = vmatpush.msra.mxu0 %v554
        %636 = vmatpush.msra.mxu0 %v552
        %637 = vmatpush.msra.mxu0 %v550
        %638 = vmatpush.msra.mxu0 %v548
        %639 = vmatpush.msra.mxu0 %v546
        %640 = vmatmul.f32.gmra.mxu0 %v512
        %v641 = vpop.f32.mrf.mxu0
        %v642 = vadd.f32 %v622, %v641
        %643 = vdwg.mxu0
        %644 = vmatpush.msra.mxu0 0.0
        %645 = vmatpush.msra.mxu0 0.0
        %646 = vmatpush.msra.mxu0 0.0
        %647 = vmatpush.msra.mxu0 0.0
        %648 = vmatpush.msra.mxu0 0.0
        %649 = vmatpush.msra.mxu0 0.0
        %650 = vmatpush.msra.mxu0 0.0
        %651 = vmatpush.msra.mxu0 0.0
        %652 = vmatpush.msra.mxu0 %v599
        %653 = vmatpush.msra.mxu0 %v590
        %654 = vmatpush.msra.mxu0 %v588
        %655 = vmatpush.msra.mxu0 %v586
        %656 = vmatpush.msra.mxu0 %v584
        %657 = vmatpush.msra.mxu0 %v582
        %658 = vmatpush.msra.mxu0 %v580
        %659 = vmatpush.msra.mxu0 %v578
        %660 = vmatmul.f32.gmra.mxu0 %v596
        %v661 = vpop.f32.mrf.mxu0
        %v662 = vadd.f32 %v642, %v661
        %663 = vdwg.mxu0
        %664 = vmatpush.msra.mxu0 %v545
        %665 = vmatpush.msra.mxu0 %v543
        %666 = vmatpush.msra.mxu0 %v541
        %667 = vmatpush.msra.mxu0 %v539
        %668 = vmatpush.msra.mxu0 %v537
        %669 = vmatpush.msra.mxu0 %v535
        %670 = vmatpush.msra.mxu0 %v533
        %671 = vmatpush.msra.mxu0 %v531
        %672 = vmatpush.msra.mxu0 %v529
        %673 = vmatpush.msra.mxu0 %v527
        %674 = vmatpush.msra.mxu0 %v525
        %675 = vmatpush.msra.mxu0 %v523
        %676 = vmatpush.msra.mxu0 %v521
        %677 = vmatpush.msra.mxu0 %v519
        %678 = vmatpush.msra.mxu0 %v517
        %679 = vmatpush.msra.mxu0 %v515
        %680 = vmatmul.f32.gmra.mxu0 %v511
        %v681 = vpop.f32.mrf.mxu0
        %v682 = vadd.f32 0.0, %v681
        %683 = vdwg.mxu0
        %684 = vmatpush.msra.mxu0 %v577
        %685 = vmatpush.msra.mxu0 %v575
        %686 = vmatpush.msra.mxu0 %v573
        %687 = vmatpush.msra.mxu0 %v571
        %688 = vmatpush.msra.mxu0 %v569
        %689 = vmatpush.msra.mxu0 %v567
        %690 = vmatpush.msra.mxu0 %v565
        %691 = vmatpush.msra.mxu0 %v563
        %692 = vmatpush.msra.mxu0 %v561
        %693 = vmatpush.msra.mxu0 %v559
        %694 = vmatpush.msra.mxu0 %v557
        %695 = vmatpush.msra.mxu0 %v555
        %696 = vmatpush.msra.mxu0 %v553
        %697 = vmatpush.msra.mxu0 %v551
        %698 = vmatpush.msra.mxu0 %v549
        %699 = vmatpush.msra.mxu0 %v547
        %700 = vmatmul.f32.gmra.mxu0 %v512
        %v701 = vpop.f32.mrf.mxu0
        %v702 = vadd.f32 %v682, %v701
        %703 = vdwg.mxu0
        %704 = vmatpush.msra.mxu0 0.0
        %705 = vmatpush.msra.mxu0 0.0
        %706 = vmatpush.msra.mxu0 0.0
        %707 = vmatpush.msra.mxu0 0.0
        %708 = vmatpush.msra.mxu0 0.0
        %709 = vmatpush.msra.mxu0 0.0
        %710 = vmatpush.msra.mxu0 0.0
        %711 = vmatpush.msra.mxu0 0.0
        %712 = vmatpush.msra.mxu0 %v602
        %713 = vmatpush.msra.mxu0 %v591
        %714 = vmatpush.msra.mxu0 %v589
        %715 = vmatpush.msra.mxu0 %v587
        %716 = vmatpush.msra.mxu0 %v585
        %717 = vmatpush.msra.mxu0 %v583
        %718 = vmatpush.msra.mxu0 %v581
        %719 = vmatpush.msra.mxu0 %v579
        %720 = vmatmul.f32.gmra.mxu0 %v596
        %v721 = vpop.f32.mrf.mxu0
        %v722 = vadd.f32 %v702, %v721
        %723 = vdwg.mxu0
        %v724 = vld [vmem:[%s4] sm:$0x3]
        %v725 = vld [vmem:[%s5] sm:$0xf]
        %v726 = vpack.c.bf16 %v722, %v662
        %v728 = vunpack.c.l.b16 %v726
        %v729 = vunpack.c.h.b16 %v726
        %v730 = vpack.c.b16 %v728, %v728
        %v731 = vpack.c.b16 %v729, %v729
        %v732 = vrot.slane %v730, 6
        %v733 = vrot.slane %v731, 6
        %734 = vrot.lane.b32.xlu0 %v732, 127
        %v735 = vpop.permute.xlu0 %734
        %736 = vrot.lane.b32.xlu0 %v733, 127
        %v737 = vpop.permute.xlu0 %736
        %v738 = vsel %vm389, %v735, %v737
        %739 = vrot.lane.b32.xlu0 %v730, 126
        %v740 = vpop.permute.xlu0 %739
        %741 = vrot.lane.b32.xlu0 %v731, 126
        %v742 = vpop.permute.xlu0 %741
        %v743 = vsel %vm401, %v740, %v742
        %v746 = vsel %vm435, %v730, %v738
        %v749 = vsel %vm435, %v731, %v737
        %v751 = vsel %vm449, %v746, %v743
        %v753 = vsel %vm449, %v749, %v742
        %755 = vset.pattern.permute.xlu0 0
        %756 = vperm.xlu0 %755, %v725
        %v757 = vpop.permute.xlu0 %756
        %vm759 = vcmask 97280
        %v761 = vsel %vm759, %v724, 0
        %vm763 = vcmask 1045504
        %v764 = vsel %vm763, %v751, 0
        %v766 = vsel %vm763, %v753, 0
        %768 = vmatpush.bf16.msra.mxu0 0
        %769 = vmatpush.bf16.msra.mxu0 0
        %770 = vmatpush.bf16.msra.mxu0 0
        %771 = vmatpush.bf16.msra.mxu0 0
        %772 = vmatpush.bf16.msra.mxu0 0
        %773 = vmatpush.bf16.msra.mxu0 0
        %774 = vmatpush.bf16.msra.mxu0 0
        %775 = vmatpush.bf16.msra.mxu0 %v764
        %776 = vmatmul.bf16.gmra.mxu0 %v761
        %v777 = vpop.f32.mrf.mxu0
        %v778 = vadd.f32 %v757, %v777
        %v779 = vpop.f32.mrf.mxu0
        %780 = vdwg.mxu0
        %781 = vmatpush.bf16.msra.mxu0 0
        %782 = vmatpush.bf16.msra.mxu0 0
        %783 = vmatpush.bf16.msra.mxu0 0
        %784 = vmatpush.bf16.msra.mxu0 0
        %785 = vmatpush.bf16.msra.mxu0 0
        %786 = vmatpush.bf16.msra.mxu0 0
        %787 = vmatpush.bf16.msra.mxu0 0
        %788 = vmatpush.bf16.msra.mxu0 %v766
        %789 = vmatmul.bf16.gmra.mxu0 %v761
        %v790 = vpop.f32.mrf.mxu0
        %v791 = vadd.f32 %v757, %v790
        %v792 = vpop.f32.mrf.mxu0
        %793 = vdwg.mxu0
        %v794 = vld [vmem:[%s6] sm:$0xff]
        %v795 = vld [vmem:[%s6 + $0x8] sm:$0xff]
        %v796 = vld [vmem:[%s6 + $0x10] sm:$0xff]
        %v797 = vld [vmem:[%s6 + $0x18] sm:$0xff]
        %v798 = vld [vmem:[%s6 + $0x20] sm:$0xff]
        %v799 = vld [vmem:[%s6 + $0x28] sm:$0xff]
        %v800 = vld [vmem:[%s6 + $0x30] sm:$0xff]
        %v801 = vld [vmem:[%s6 + $0x38] sm:$0xff]
        %v802 = vld [vmem:[%s6 + $0x40] sm:$0xff]
        %v803 = vld [vmem:[%s6 + $0x48] sm:$0xff]
        %v804 = vld [vmem:[%s6 + $0x50] sm:$0xff]
        %v805 = vld [vmem:[%s6 + $0x58] sm:$0xff]
        %v806 = vld [vmem:[%s6 + $0x60] sm:$0xff]
        %v807 = vld [vmem:[%s6 + $0x68] sm:$0xff]
        %v808 = vld [vmem:[%s6 + $0x70] sm:$0xff]
        %v809 = vld [vmem:[%s6 + $0x78] sm:$0xff]
        %v810 = vld [vmem:[%s6 + $0x80] sm:$0xff]
        %v811 = vld [vmem:[%s6 + $0x88] sm:$0xff]
        %v812 = vld [vmem:[%s6 + $0x90] sm:$0xff]
        %v813 = vld [vmem:[%s6 + $0x98] sm:$0x3f]
        %v814 = vld [vmem:[%s7] sm:$0xff]
        %v815 = vld [vmem:[%s7 + $0x8] sm:$0xff]
        %v816 = vld [vmem:[%s7 + $0x10] sm:$0xff]
        %v817 = vld [vmem:[%s7 + $0x18] sm:$0xff]
        %v818 = vld [vmem:[%s7 + $0x20] sm:$0xff]
        %v819 = vld [vmem:[%s7 + $0x28] sm:$0xff]
        %v820 = vld [vmem:[%s7 + $0x30] sm:$0xff]
        %v821 = vld [vmem:[%s7 + $0x38] sm:$0xff]
        %v822 = vld [vmem:[%s7 + $0x40] sm:$0xff]
        %v823 = vld [vmem:[%s7 + $0x48] sm:$0xff]
        %v824 = vld [vmem:[%s7 + $0x50] sm:$0xff]
        %v825 = vld [vmem:[%s7 + $0x58] sm:$0xff]
        %v826 = vld [vmem:[%s7 + $0x60] sm:$0xff]
        %v827 = vld [vmem:[%s7 + $0x68] sm:$0xff]
        %v828 = vld [vmem:[%s7 + $0x70] sm:$0xff]
        %v829 = vld [vmem:[%s7 + $0x78] sm:$0xff]
        %v830 = vld [vmem:[%s7 + $0x80] sm:$0xff]
        %v831 = vld [vmem:[%s7 + $0x88] sm:$0xff]
        %v832 = vld [vmem:[%s7 + $0x90] sm:$0xff]
        %v833 = vld [vmem:[%s7 + $0x98] sm:$0xff]
        %v834 = vld [vmem:[%s7 + $0xa0] sm:$0xff]
        %v835 = vld [vmem:[%s7 + $0xa8] sm:$0xff]
        %v836 = vld [vmem:[%s7 + $0xb0] sm:$0xff]
        %v837 = vld [vmem:[%s7 + $0xb8] sm:$0xff]
        %v838 = vld [vmem:[%s7 + $0xc0] sm:$0xff]
        %v839 = vld [vmem:[%s7 + $0xc8] sm:$0xff]
        %v840 = vld [vmem:[%s7 + $0xd0] sm:$0xff]
        %v841 = vld [vmem:[%s7 + $0xd8] sm:$0xff]
        %v842 = vld [vmem:[%s7 + $0xe0] sm:$0xff]
        %v843 = vld [vmem:[%s7 + $0xe8] sm:$0xff]
        %v844 = vld [vmem:[%s7 + $0xf0] sm:$0xff]
        %v845 = vld [vmem:[%s7 + $0xf8] sm:$0xff]
        %v846 = vld [vmem:[%s7 + $0x100] sm:$0xff]
        %v847 = vld [vmem:[%s7 + $0x108] sm:$0xff]
        %v848 = vld [vmem:[%s7 + $0x110] sm:$0xff]
        %v849 = vld [vmem:[%s7 + $0x118] sm:$0xff]
        %v850 = vld [vmem:[%s7 + $0x120] sm:$0xff]
        %v851 = vld [vmem:[%s7 + $0x128] sm:$0xff]
        %v852 = vld [vmem:[%s7 + $0x130] sm:$0xff]
        %v853 = vld [vmem:[%s7 + $0x138] sm:$0xff]
        %854 = vst [vmem:[#allocation1] ss:$4 sm:$0xff] %v359
        %v855 = vld.sshfl [vmem:[#allocation1] sm:$0xff pattern:$0x73625140]
        %v856 = vld.sshfl [vmem:[#allocation1 + $0x8] sm:$0xff pattern:$0x73625140]
        %v857 = vld.sshfl [vmem:[#allocation1 + $0x10] sm:$0xff pattern:$0x73625140]
        %vm860 = vcmask 523264
        %v861 = vsel %vm860, %v857, 0
        %863 = vmatpush.msra.mxu0 %v829
        %864 = vmatpush.msra.mxu0 %v828
        %865 = vmatpush.msra.mxu0 %v827
        %866 = vmatpush.msra.mxu0 %v826
        %867 = vmatpush.msra.mxu0 %v825
        %868 = vmatpush.msra.mxu0 %v824
        %869 = vmatpush.msra.mxu0 %v823
        %870 = vmatpush.msra.mxu0 %v822
        %871 = vmatpush.msra.mxu0 %v821
        %872 = vmatpush.msra.mxu0 %v820
        %873 = vmatpush.msra.mxu0 %v819
        %874 = vmatpush.msra.mxu0 %v818
        %875 = vmatpush.msra.mxu0 %v817
        %876 = vmatpush.msra.mxu0 %v816
        %877 = vmatpush.msra.mxu0 %v815
        %878 = vmatpush.msra.mxu0 %v814
        %879 = vmatmul.f32.gmra.mxu0 %v855
        %v880 = vpop.f32.mrf.mxu0
        %v881 = vadd.f32 0.0, %v880
        %882 = vdwg.mxu0
        %883 = vmatpush.msra.mxu0 %v845
        %884 = vmatpush.msra.mxu0 %v844
        %885 = vmatpush.msra.mxu0 %v843
        %886 = vmatpush.msra.mxu0 %v842
        %887 = vmatpush.msra.mxu0 %v841
        %888 = vmatpush.msra.mxu0 %v840
        %889 = vmatpush.msra.mxu0 %v839
        %890 = vmatpush.msra.mxu0 %v838
        %891 = vmatpush.msra.mxu0 %v837
        %892 = vmatpush.msra.mxu0 %v836
        %893 = vmatpush.msra.mxu0 %v835
        %894 = vmatpush.msra.mxu0 %v834
        %895 = vmatpush.msra.mxu0 %v833
        %896 = vmatpush.msra.mxu0 %v832
        %897 = vmatpush.msra.mxu0 %v831
        %898 = vmatpush.msra.mxu0 %v830
        %899 = vmatmul.f32.gmra.mxu0 %v856
        %v900 = vpop.f32.mrf.mxu0
        %v901 = vadd.f32 %v881, %v900
        %902 = vdwg.mxu0
        %903 = vmatpush.msra.mxu0 0.0
        %904 = vmatpush.msra.mxu0 0.0
        %905 = vmatpush.msra.mxu0 0.0
        %906 = vmatpush.msra.mxu0 0.0
        %907 = vmatpush.msra.mxu0 0.0
        %908 = vmatpush.msra.mxu0 0.0
        %909 = vmatpush.msra.mxu0 0.0
        %910 = vmatpush.msra.mxu0 0.0
        %911 = vmatpush.msra.mxu0 %v853
        %912 = vmatpush.msra.mxu0 %v852
        %913 = vmatpush.msra.mxu0 %v851
        %914 = vmatpush.msra.mxu0 %v850
        %915 = vmatpush.msra.mxu0 %v849
        %916 = vmatpush.msra.mxu0 %v848
        %917 = vmatpush.msra.mxu0 %v847
        %918 = vmatpush.msra.mxu0 %v846
        %919 = vmatmul.f32.gmra.mxu0 %v861
        %v920 = vpop.f32.mrf.mxu0
        %v921 = vadd.f32 %v901, %v920
        %922 = vdwg.mxu0
        %v923 = vld [vmem:[%s8] sm:$0x3]
        %v924 = vld [vmem:[%s9] sm:$0xf]
        %v925 = vpack.c.bf16 %v921, %v921
        %927 = vset.pattern.permute.xlu0 0
        %928 = vperm.xlu0 %927, %v924
        %v929 = vpop.permute.xlu0 %928
        %vm931 = vcmask 15360
        %v933 = vsel %vm931, %v923, 0
        %v936 = vsel %vm425, %v925, 0
        %938 = vmatpush.bf16.msra.mxu0 0
        %939 = vmatpush.bf16.msra.mxu0 0
        %940 = vmatpush.bf16.msra.mxu0 0
        %941 = vmatpush.bf16.msra.mxu0 0
        %942 = vmatpush.bf16.msra.mxu0 0
        %943 = vmatpush.bf16.msra.mxu0 0
        %944 = vmatpush.bf16.msra.mxu0 0
        %945 = vmatpush.bf16.msra.mxu0 %v936
        %946 = vmatmul.bf16.gmra.mxu0 %v933
        %v947 = vpop.f32.mrf.mxu0
        %v948 = vadd.f32 %v929, %v947
        %v949 = vpop.f32.mrf.mxu0
        %950 = vdwg.mxu0
        %vm951 = vcmask 244736
        %v953 = vsel %vm951, %v791, 0
        %v956 = vsel %vm763, %v813, 0
        %958 = vmatpush.msra.mxu0 %v809
        %959 = vmatpush.msra.mxu0 %v808
        %960 = vmatpush.msra.mxu0 %v807
        %961 = vmatpush.msra.mxu0 %v806
        %962 = vmatpush.msra.mxu0 %v805
        %963 = vmatpush.msra.mxu0 %v804
        %964 = vmatpush.msra.mxu0 %v803
        %965 = vmatpush.msra.mxu0 %v802
        %966 = vmatpush.msra.mxu0 %v801
        %967 = vmatpush.msra.mxu0 %v800
        %968 = vmatpush.msra.mxu0 %v799
        %969 = vmatpush.msra.mxu0 %v798
        %970 = vmatpush.msra.mxu0 %v797
        %971 = vmatpush.msra.mxu0 %v796
        %972 = vmatpush.msra.mxu0 %v795
        %973 = vmatpush.msra.mxu0 %v794
        %974 = vmatmul.f32.gmra.mxu0 %v778
        %v975 = vpop.f32.mrf.mxu0
        %v976 = vadd.f32 %v948, %v975
        %977 = vdwg.mxu0
        %978 = vmatpush.msra.mxu0 0.0
        %979 = vmatpush.msra.mxu0 0.0
        %980 = vmatpush.msra.mxu0 0.0
        %981 = vmatpush.msra.mxu0 0.0
        %982 = vmatpush.msra.mxu0 0.0
        %983 = vmatpush.msra.mxu0 0.0
        %984 = vmatpush.msra.mxu0 0.0
        %985 = vmatpush.msra.mxu0 0.0
        %986 = vmatpush.msra.mxu0 0.0
        %987 = vmatpush.msra.mxu0 0.0
        %988 = vmatpush.msra.mxu0 0.0
        %989 = vmatpush.msra.mxu0 0.0
        %990 = vmatpush.msra.mxu0 %v956
        %991 = vmatpush.msra.mxu0 %v812
        %992 = vmatpush.msra.mxu0 %v811
        %993 = vmatpush.msra.mxu0 %v810
        %994 = vmatmul.f32.gmra.mxu0 %v953
        %v995 = vpop.f32.mrf.mxu0
        %v996 = vadd.f32 %v976, %v995
        %997 = vdwg.mxu0
        %v998 = vmax.f32 %v996, 0.0
        %999 = vst [vmem:[%s352] sm:$0xf] %v998
        %s1000 = sand.u32 %s247, 1
        %s1001 = scalar_lea.sflag [#allocation3], %s1000
        %s1002 = sand.u32 %s247, 1
        %s1003 = smul.addr %s1002, 4
        %s1004 = scalar_lea.vmem [#allocation2], %s1003
        // Predicated region
        $region61: #{tpu_custom_call.1} parent=59 // pred_check
          %p1005 = pneg %p257
        $region62: #{tpu_custom_call.1} parent=59 // pred_check_branch
          %1007 = sbr.rel (%p1005) target = $region64
        $region63: #{tpu_custom_call.1} parent=59 // pred_region
          %1009 = vsyncadd %s1001, 0
          %s1010 = smul.addr %s24, 4
          %s1011 = scalar_lea.hbm %s10, %s1010
          %s1013 = sshll.u32 %s1004, 4
          %s1014 = int_to_ptr.vmem [resolvable:$true] %s1013
          %s1015 = sshll.u32 %s1011, 4
          %s1016 = int_to_ptr.hbm [resolvable:$true] %s1015
          %1018 = dma.vmem_to_hbm [thread:$0]  %s1014, 64, %s1016, %s1001
        $region64: #{tpu_custom_call.1} parent=59 // pred_fallthru
          _
      $region60: #{tpu_custom_call.1} parent=5 // pred_fallthru
        _
      %p1019 = scmp.le.s32.totalorder 2, %s19
      // Predicated region
      $region65: #{tpu_custom_call.1} parent=5 // pred_check
        %p1020 = pneg %p1019
      $region66: #{tpu_custom_call.1} parent=5 // pred_check_branch
        %1022 = sbr.rel (%p1020) target = $region68
      $region67: #{tpu_custom_call.1} parent=5 // pred_region
        %s1023 = ssub.s32 %s19, 2
        // Predicated region
        $region69: #{tpu_custom_call.1} parent=67 // pred_check
          %p1024 = pneg %p263
        $region70: #{tpu_custom_call.1} parent=67 // pred_check_branch
          %1026 = sbr.rel (%p1024) target = $region72
        $region71: #{tpu_custom_call.1} parent=67 // pred_region
          %s1027 = sand.u32 %s248, 1
          %s1028 = scalar_lea.sflag [#allocation3], %s1027
          %s1029 = sand.u32 %s248, 1
          %s1030 = smul.addr %s1029, 4
          %s1031 = scalar_lea.vmem [#allocation2], %s1030
          %1033 = dma.done %s1028, 64
        $region72: #{tpu_custom_call.1} parent=67 // pred_fallthru
          _
      $region68: #{tpu_custom_call.1} parent=5 // pred_fallthru
        _
    $region6: #{tpu_custom_call.1} parent=1 // loop_footer
      %s23 = sadd.s32 1, %s19
    $region7: #{tpu_custom_call.1} parent=1 // loop_footer_branch
      %18 = sbr.rel target = $region3
    $region8: #{tpu_custom_call.1} parent=1 // loop_exit
      _
    %1034 = vsyncpa [#allocation3], 1
    %s1035 = scalar_lea.sflag [#allocation3], 1
    %1036 = vsyncpa %s1035, 1

</llo_original>
